<compile_context>
chip_gen: v5e
topology: v5e:2x2
jax: 0.10.0
libtpu: 0.0.40
codegen_flags: <defaults>
</compile_context>

<pallas_src>
import jax
import jax.numpy as jnp
from jax import lax
from jax.experimental import pallas as pl
from jax.experimental.pallas import tpu as pltpu


def logreg_kernel(x_ref, w_ref, b_ref, o_ref):
    """One row-tile of LogReg.forward.

    x_ref: (tm, F)  input rows
    w_ref: (C, F)   nn.Linear weight, resident across the whole grid
    b_ref: (C, 1)   bias column
    o_ref: (C, tm)  transposed log-probabilities (lane-dense store)
    """
    x = x_ref[...]
    w = w_ref[...]
    # logits^T = W @ x^T : contract on F on the MXU, no explicit transpose
    # of either operand (rhs-transposed dot_general).
    logits_t = lax.dot_general(
        w, x,
        dimension_numbers=(((1,), (1,)), ((), ())),
        preferred_element_type=jnp.float32,
    ) + b_ref[...]
    # Numerically stable log-softmax over the class (sublane) axis.  In this
    # transposed layout every vreg is lane-dense, so exp/log/max run on ~16x
    # fewer vregs than the (tm, C) layout would.
    m = jnp.max(logits_t, axis=0, keepdims=True)
    shifted = logits_t - m
    lse = jnp.log(jnp.sum(jnp.exp(shifted), axis=0, keepdims=True))
    o_ref[...] = (shifted - lse).astype(o_ref.dtype)


def _round_up(a, b):
    return ((a + b - 1) // b) * b


def logreg_forward(x, weight, bias, *, tm=2048):
    """log_softmax(x @ weight.T + bias, axis=-1) via Pallas."""
    N, F = x.shape
    C, F2 = weight.shape
    assert F == F2, "weight must be (nb_classes, ft_in)"

    x = x.astype(jnp.float32)
    weight = weight.astype(jnp.float32)
    bias2d = bias.astype(jnp.float32).reshape(C, 1)

    # --- row-tile selection -------------------------------------------------
    # Explicit VMEM budget (double-buffered x tile + transposed out tile, f32)
    # against a conservative 8 MiB so the same tiles fit v5e's 16 MiB scoped
    # default as well as v7x's 32 MiB scoped / 64 MiB physical VMEM.
    vmem_budget = 8 * 1024 * 1024
    bytes_per_row = 2 * 4 * (F + C)              # 2 buffers * f32 * (in + out)
    tm_cap = max(128, (vmem_budget // bytes_per_row) // 128 * 128)
    tm = min(tm, tm_cap)

    n_pad8 = _round_up(N, 8)
    if n_pad8 <= tm:
        if n_pad8 >= 256:
            # >=2 balanced, lane-aligned tiles so v7x's two TensorCores both
            # get work (harmless on single-TC v5e/v6e).
            tm = _round_up(pl.cdiv(n_pad8, 2), 128)
        else:
            tm = n_pad8                          # tiny problem: single tile
    else:
        tm = (tm // 128) * 128                   # keep output stores lane-dense
    n_pad = _round_up(N, tm)

    # Tail handling: zero-pad extra rows; they yield finite log-probs
    # (log_softmax of the bias) and are sliced off below.
    if n_pad != N:
        x = jnp.pad(x, ((0, n_pad - N), (0, 0)))

    out_t = pl.pallas_call(
        logreg_kernel,
        out_shape=jax.ShapeDtypeStruct((C, n_pad), jnp.float32),
        grid_spec=pltpu.PrefetchScalarGridSpec(
            num_scalar_prefetch=0,
            grid=(n_pad // tm,),
            in_specs=[
                pl.BlockSpec((tm, F), lambda i: (i, 0)),   # x row tile
                pl.BlockSpec((C, F), lambda i: (0, 0)),    # weight, resident
                pl.BlockSpec((C, 1), lambda i: (0, 0)),    # bias column
            ],
            out_specs=pl.BlockSpec((C, tm), lambda i: (0, i)),
        ),
        compiler_params=pltpu.CompilerParams(
            dimension_semantics=("parallel",),
        ),
    )(x, weight, bias2d)

    # Back to the nn.Linear layout: (N, C) log-probabilities.
    return out_t.T[:N]


def xavier_uniform(key, shape):
    # torch.nn.init.xavier_uniform_ for a [out, in] Linear weight
    fan_out, fan_in = shape
    bound = (6.0 / (fan_in + fan_out)) ** 0.5
    return jax.random.uniform(key, shape, minval=-bound, maxval=bound,
                              dtype=jnp.float32)


if __name__ == "__main__":
    key = jax.random.PRNGKey(0)
    k_x, k_w, k_x2 = jax.random.split(key, 3)

    # Small shapes consistent with LogReg(ft_in, nb_classes).
    N, FT_IN, NB_CLASSES = 16, 32, 8

    x = jax.random.normal(k_x, (N, FT_IN), dtype=jnp.float32)
    weight = xavier_uniform(k_w, (NB_CLASSES, FT_IN))
    bias = jnp.zeros((NB_CLASSES,), dtype=jnp.float32)   # bias.data.fill_(0.0)

    out = jax.block_until_ready(logreg_forward(x, weight, bias))
    ref = jax.nn.log_softmax(x @ weight.T + bias, axis=-1)
    assert out.shape == (N, NB_CLASSES)
    assert jnp.allclose(out, ref, atol=1e-5, rtol=1e-5)

    # Exercise the cdiv / padded-tail / multi-tile path on a ragged N.
    N2 = 300
    x2 = jax.random.normal(k_x2, (N2, FT_IN), dtype=jnp.float32)
    out2 = jax.block_until_ready(logreg_forward(x2, weight, bias))
    ref2 = jax.nn.log_softmax(x2 @ weight.T + bias, axis=-1)
    assert out2.shape == (N2, NB_CLASSES)
    assert jnp.allclose(out2, ref2, atol=1e-5, rtol=1e-5)

    print("KERNEL_OK")
</pallas_src>

<mosaic_0001>
module attributes {stable_mosaic.version = 11 : i64} {
  func.func @logreg_kernel(%arg0: i32, %arg1: memref<16x32xf32, #tpu.memory_space<vmem>>, %arg2: memref<8x32xf32, #tpu.memory_space<vmem>>, %arg3: memref<8x1xf32, #tpu.memory_space<vmem>>, %arg4: memref<8x16xf32, #tpu.memory_space<vmem>>) attributes {dimension_semantics = [#tpu.dimension_semantics<parallel>], iteration_bounds = array<i64: 1>, scalar_prefetch = 0 : i64, scratch_operands = 0 : i64, tpu.core_type = #tpu.core_type<tc>, window_params = [{transform_indices = @transform_0, window_bounds = array<i64: 16, 32>}, {pipeline_mode = #tpu.pipeline_mode<synchronous>, transform_indices = @transform_1, window_bounds = array<i64: 8, 32>}, {pipeline_mode = #tpu.pipeline_mode<synchronous>, transform_indices = @transform_2, window_bounds = array<i64: 8, 1>}, {transform_indices = @transform_3, window_bounds = array<i64: 8, 16>}]} {
    %c0 = arith.constant 0 : index
    %c0_0 = arith.constant 0 : index
    %0 = vector.load %arg1[%c0, %c0_0] : memref<16x32xf32, #tpu.memory_space<vmem>>, vector<16x32xf32>
    %c0_1 = arith.constant 0 : index
    %c0_2 = arith.constant 0 : index
    %1 = vector.load %arg2[%c0_1, %c0_2] : memref<8x32xf32, #tpu.memory_space<vmem>>, vector<8x32xf32>
    %cst = arith.constant dense<0.000000e+00> : vector<8x16xf32>
    %2 = tpu.matmul %1, %0, %cst {dimension_numbers = #tpu.dot_dimension_numbers<[1], [1], [0], [0], [0, 0, 1, 0], [], []>} : vector<8x32xf32>, vector<16x32xf32>, vector<8x16xf32> -> vector<8x16xf32>
    %c0_3 = arith.constant 0 : index
    %c0_4 = arith.constant 0 : index
    %3 = vector.load %arg3[%c0_3, %c0_4] : memref<8x1xf32, #tpu.memory_space<vmem>>, vector<8x1xf32>
    %4 = vector.broadcast %3 : vector<8x1xf32> to vector<8x16xf32>
    %5 = arith.addf %2, %4 : vector<8x16xf32>
    %cst_5 = arith.constant dense<0xFF800000> : vector<16xf32>
    %6 = vector.multi_reduction <maximumf>, %5, %cst_5 [0] : vector<8x16xf32> to vector<16xf32>
    %7 = vector.shape_cast %6 : vector<16xf32> to vector<1x16xf32>
    %8 = vector.broadcast %7 : vector<1x16xf32> to vector<8x16xf32>
    %9 = arith.subf %5, %8 : vector<8x16xf32>
    %10 = math.exp %9 : vector<8x16xf32>
    %cst_6 = arith.constant dense<0.000000e+00> : vector<16xf32>
    %11 = vector.multi_reduction <add>, %10, %cst_6 [0] : vector<8x16xf32> to vector<16xf32>
    %12 = vector.shape_cast %11 : vector<16xf32> to vector<1x16xf32>
    %13 = math.log %12 : vector<1x16xf32>
    %14 = vector.broadcast %13 : vector<1x16xf32> to vector<8x16xf32>
    %15 = arith.subf %9, %14 : vector<8x16xf32>
    %c0_7 = arith.constant 0 : index
    %c0_8 = arith.constant 0 : index
    %16 = vector.load %arg4[%c0_7, %c0_8] : memref<8x16xf32, #tpu.memory_space<vmem>>, vector<8x16xf32>
    tpu.vector_store %arg4[%c0_7, %c0_8], %15 {strides = array<i32>} : memref<8x16xf32, #tpu.memory_space<vmem>>, vector<8x16xf32>,
    return
  }
  func.func @transform_0(%arg0: i32) -> (i32, i32) {
    %c0_i32 = arith.constant 0 : i32
    %c0_i32_0 = arith.constant 0 : i32
    return %arg0, %c0_i32 : i32, i32
  }
  func.func @transform_1(%arg0: i32) -> (i32, i32) {
    %c0_i32 = arith.constant 0 : i32
    %c0_i32_0 = arith.constant 0 : i32
    %c0_i32_1 = arith.constant 0 : i32
    return %c0_i32, %c0_i32_0 : i32, i32
  }
  func.func @transform_2(%arg0: i32) -> (i32, i32) {
    %c0_i32 = arith.constant 0 : i32
    %c0_i32_0 = arith.constant 0 : i32
    %c0_i32_1 = arith.constant 0 : i32
    return %c0_i32, %c0_i32_0 : i32, i32
  }
  func.func @transform_3(%arg0: i32) -> (i32, i32) {
    %c0_i32 = arith.constant 0 : i32
    %c0_i32_0 = arith.constant 0 : i32
    return %c0_i32, %arg0 : i32, i32
  }
}

</mosaic_0001>

<llo_original>
// kernel: tpu_custom_call.1
$region0: #{tpu_custom_call.1}
  #allocation0 [shape = 'u32[]', space=smem, size = 0x4, offset = 0x4, fixed_abs, tag = 'smem constant byte address 0x4 - core index']
  #allocation1 [shape = 'u32[72,128]{1,0:T(1,128)}', space=vmem, size = 0x9000, scoped, tag = 'internal scratch']
  %s0 = inlined_call_operand.hbm [shape: f32[16,32], index: 0, kind: input, shape index: {}]
  %s1 = inlined_call_operand.vmem [shape: f32[8,32], index: 1, kind: input, shape index: {}]
  %s2 = inlined_call_operand.vmem [shape: f32[8,1], index: 2, kind: input, shape index: {}]
  %s3 = inlined_call_operand.hbm [shape: f32[8,16], index: 3, kind: output, shape index: {}]
  %s4 = sld [smem:[#allocation0]]
  $region26: #{tpu_custom_call.1} parent=0
    _
  %s6 = ssub.s32 1, %s4
  %s7 = scalar_select 0, %s6, %s4
  $region1: #{tpu_custom_call.1} parent=0
    #allocation2 [shape = 'u8[8192]{0}', space=vmem, size = 0x2000, scoped, tag = 'input window, operand 0, single buffered']
    #allocation3 [shape = 's32[1]{0}', space=sflag, size = 0x4, scoped, tag = 'scoped memory for tpu_custom_call.1']
    #allocation4 [shape = 's32[1]{0}', space=sflag, size = 0x4, scoped, tag = 'scoped memory for tpu_custom_call.1']
    #allocation5 [shape = 'u8[4096]{0}', space=vmem, size = 0x1000, scoped, tag = 'output window, operand 0, single buffered']
    %8 = vsyncpa [#allocation3], 0
    %9 = vsyncpa [#allocation4], 0
    // Predicated region
    $region2: #{tpu_custom_call.1} parent=1 // pred_check
      _
    $region3: #{tpu_custom_call.1} parent=1 // pred_check_branch
      %11 = sbr.rel (0) target = $region5
    $region4: #{tpu_custom_call.1} parent=1 // pred_region
      %13 = vsyncadd [#allocation3], 0
      %s14 = sshll.u32 %s0, 4
      %s15 = int_to_ptr.hbm [resolvable:$true] %s14
      %s16 = sshll.u32 [#allocation2], 4
      %s17 = int_to_ptr.vmem [resolvable:$true] %s16
      %22 = dma.hbm_to_vmem [thread:$0]  %s15, 256, %s17, [#allocation3], 128, 128, 8
    $region5: #{tpu_custom_call.1} parent=1 // pred_fallthru
      _
    // Predicated region
    $region6: #{tpu_custom_call.1} parent=1 // pred_check
      _
    $region7: #{tpu_custom_call.1} parent=1 // pred_check_branch
      %24 = sbr.rel (0) target = $region9
    $region8: #{tpu_custom_call.1} parent=1 // pred_region
      _
    $region9: #{tpu_custom_call.1} parent=1 // pred_fallthru
      _
    // Predicated region
    $region10: #{tpu_custom_call.1} parent=1 // pred_check
      _
    $region11: #{tpu_custom_call.1} parent=1 // pred_check_branch
      %26 = sbr.rel (0) target = $region13
    $region12: #{tpu_custom_call.1} parent=1 // pred_region
      _
    $region13: #{tpu_custom_call.1} parent=1 // pred_fallthru
      _
    // Predicated region
    $region14: #{tpu_custom_call.1} parent=1 // pred_check
      _
    $region15: #{tpu_custom_call.1} parent=1 // pred_check_branch
      %28 = sbr.rel (0) target = $region17
    $region16: #{tpu_custom_call.1} parent=1 // pred_region
      %30 = dma.done [#allocation3], 256
    $region17: #{tpu_custom_call.1} parent=1 // pred_fallthru
      _
    %v31 = vld [vmem:[#allocation2] sm:$0xff]
    %v32 = vld [vmem:[#allocation2 + $0x8] sm:$0xff]
    %v33 = vld [vmem:[%s1] sm:$0xff]
    %v34 = vld [vmem:[%s2] sm:$0xff]
    %36 = vset.pattern.permute.xlu0 0
    %37 = vperm.xlu0 %36, %v34
    %v38 = vpop.permute.xlu0 %37
    %vm40 = vcmask 261120
    %v42 = vsel %vm40, %v33, 0
    %v45 = vsel %vm40, %v31, 0
    %v48 = vsel %vm40, %v32, 0
    %50 = vmatpush.xpose.msra.mxu0 0.0
    %51 = vmatpush.xpose.msra.mxu0 0.0
    %52 = vmatpush.xpose.msra.mxu0 0.0
    %53 = vmatpush.xpose.msra.mxu0 0.0
    %54 = vmatpush.xpose.msra.mxu0 0.0
    %55 = vmatpush.xpose.msra.mxu0 0.0
    %56 = vmatpush.xpose.msra.mxu0 0.0
    %57 = vmatpush.xpose.msra.mxu0 0.0
    %58 = vmatpush.xpose.msra.mxu0 0.0
    %59 = vmatpush.xpose.msra.mxu0 0.0
    %60 = vmatpush.xpose.msra.mxu0 0.0
    %61 = vmatpush.xpose.msra.mxu0 0.0
    %62 = vmatpush.xpose.msra.mxu0 0.0
    %63 = vmatpush.xpose.msra.mxu0 0.0
    %64 = vmatpush.xpose.msra.mxu0 %v48
    %65 = vmatpush.xpose.msra.mxu0 %v45
    %66 = vmatmul.f32.gmra.mxu0 %v42
    %v67 = vpop.f32.mrf.mxu0
    %v68 = vadd.f32 %v38, %v67
    %69 = vdwg.mxu0
    %vm70 = vcmask 130048
    %v71 = vsel %vm70, %v68, -inf
    %v72 = vrot.slane %v71, 4
    %v73 = vmax.f32 %v71, %v72
    %v74 = vrot.slane %v73, 2
    %v75 = vmax.f32 %v73, %v74
    %v76 = vrot.slane %v75, 1
    %v77 = vmax.f32 %v75, %v76
    %v78 = vsub.f32 %v68, %v77
    %v79 = vmul.f32 %v78, 1.442695
    %v80 = vpow.pop %v79
    %v81 = vsel %vm70, %v80, 0.0
    %v82 = vrot.slane %v81, 4
    %v83 = vadd.f32 %v81, %v82
    %v84 = vrot.slane %v83, 2
    %v85 = vadd.f32 %v83, %v84
    %v86 = vrot.slane %v85, 1
    %v87 = vadd.f32 %v85, %v86
    %v88 = vlog2.pop %v87
    %v89 = vmul.f32 %v88, 0.6931472
    %v90 = vsub.f32 %v78, %v89
    %91 = vst.msk [vmem:[#allocation5] sm:$0xff] %vm70, %v90
    // Predicated region
    $region18: #{tpu_custom_call.1} parent=1 // pred_check
      _
    $region19: #{tpu_custom_call.1} parent=1 // pred_check_branch
      %93 = sbr.rel (0) target = $region21
    $region20: #{tpu_custom_call.1} parent=1 // pred_region
      %95 = vsyncadd [#allocation4], 0
      %s97 = sshll.u32 [#allocation5], 4
      %s98 = int_to_ptr.vmem [resolvable:$true] %s97
      %s99 = sshll.u32 %s3, 4
      %s100 = int_to_ptr.hbm [resolvable:$true] %s99
      %102 = dma.vmem_to_hbm [thread:$0]  %s98, 128, %s100, [#allocation4]
    $region21: #{tpu_custom_call.1} parent=1 // pred_fallthru
      _
    // Predicated region
    $region22: #{tpu_custom_call.1} parent=1 // pred_check
      _
    $region23: #{tpu_custom_call.1} parent=1 // pred_check_branch
      %104 = sbr.rel (0) target = $region25
    $region24: #{tpu_custom_call.1} parent=1 // pred_region
      %106 = dma.done [#allocation4], 128
    $region25: #{tpu_custom_call.1} parent=1 // pred_fallthru
      _
    %107 = vsyncpa [#allocation3], 1
    %108 = vsyncpa [#allocation4], 1

</llo_original>
